<compile_context>
chip_gen: v7x
topology: tpu7x:2x2x1
jax: 0.10.0
libtpu: 0.0.40
codegen_flags: <defaults>
</compile_context>

<pallas_src>
import math
import functools

import numpy as np
import jax
import jax.numpy as jnp
from jax.experimental import pallas as pl
from jax.experimental.pallas import tpu as pltpu

INV_SQRT2 = 1.0 / math.sqrt(2.0)


# ----------------------------------------------------------------------------
# Pallas kernel: one (batch, T-tile) block.
#   gate = Wmg@x + Wcg@cond + bg_eff      (bg_eff folds diffusion projection)
#   filt = Wmf@x + Wcf@cond + bf_eff
#   g    = sigmoid(gate) * tanh(filt)
#   res  = (x + Wor@g + bor) / sqrt(2)
#   skip = Wos@g + bos
# ----------------------------------------------------------------------------
def _residual_block_kernel(x_ref, cond_ref,
                           wmg_ref, wmf_ref, wcg_ref, wcf_ref,
                           wor_ref, wos_ref,
                           bg_ref, bft_ref, bor_ref, bos_ref,
                           res_ref, skip_ref):
    x = x_ref[0]                        # (C, TILE_T) f32 (needed f32 for residual)
    x_bf = x.astype(jnp.bfloat16)       # bf16 operand for MXU
    cond = cond_ref[0]                  # (S, TILE_T) bf16

    gate = (jnp.dot(wmg_ref[...], x_bf, preferred_element_type=jnp.float32)
            + jnp.dot(wcg_ref[...], cond, preferred_element_type=jnp.float32)
            + bg_ref[0])                                          # (C, TILE_T) f32
    filt = (jnp.dot(wmf_ref[...], x_bf, preferred_element_type=jnp.float32)
            + jnp.dot(wcf_ref[...], cond, preferred_element_type=jnp.float32)
            + bft_ref[0])                                         # (C, TILE_T) f32

    g = jax.nn.sigmoid(gate) * jnp.tanh(filt)                     # f32 elementwise
    g_bf = g.astype(jnp.bfloat16)

    residual = (jnp.dot(wor_ref[...], g_bf, preferred_element_type=jnp.float32)
                + bor_ref[...])                                   # (C, TILE_T)
    skip = (jnp.dot(wos_ref[...], g_bf, preferred_element_type=jnp.float32)
            + bos_ref[...])                                       # (C, TILE_T)

    res_ref[0] = ((x + residual) * INV_SQRT2).astype(res_ref.dtype)
    skip_ref[0] = skip.astype(skip_ref.dtype)


def _pick_tile_t(T, max_tile):
    """Largest multiple-of-128 divisor of T that is <= max_tile; else full T."""
    if T % 128 != 0:
        return T  # full-extent block (always legal); fine for small T
    best = 128
    t = 128
    while t <= min(T, max_tile):
        if T % t == 0:
            best = t
        t += 128
    return best


def residual_block_forward(x, cond_info, diffusion_emb, params, max_tile_t=512):
    """x: (B, C, K, L), cond_info: (B, S, K, L), diffusion_emb: (B, E)."""
    B, C, K, L = x.shape
    S = cond_info.shape[1]
    T = K * L
    tile_t = _pick_tile_t(T, max_tile_t)
    n_t = T // tile_t

    # ---- glue: channels-first slabs (reshape only; no transposes) ----
    x_ct = x.reshape(B, C, T).astype(jnp.float32)               # (B, C, T) f32
    cond_ct = cond_info.reshape(B, S, T).astype(jnp.bfloat16)   # (B, S, T) bf16

    # ---- hoist diffusion projection, fold into per-batch effective bias ----
    dp = diffusion_emb @ params["w_diff"].T + params["b_diff"]          # (B, C) f32
    b_mid_eff = dp @ params["w_mid"].T + params["b_mid"] + params["b_cond"]  # (B, 2C)
    b_gate = b_mid_eff[:, :C].reshape(B, C, 1).astype(jnp.float32)
    b_filt = b_mid_eff[:, C:].reshape(B, C, 1).astype(jnp.float32)

    # ---- pre-split weights per output half, cast to bf16 ----
    bf16 = jnp.bfloat16
    w_mid_g = params["w_mid"][:C].astype(bf16)    # (C, C)
    w_mid_f = params["w_mid"][C:].astype(bf16)    # (C, C)
    w_cond_g = params["w_cond"][:C].astype(bf16)  # (C, S)
    w_cond_f = params["w_cond"][C:].astype(bf16)  # (C, S)
    w_out_r = params["w_out"][:C].astype(bf16)    # (C, C)
    w_out_s = params["w_out"][C:].astype(bf16)    # (C, C)
    b_out_r = params["b_out"][:C].reshape(C, 1).astype(jnp.float32)
    b_out_s = params["b_out"][C:].reshape(C, 1).astype(jnp.float32)

    full2d = lambda shape: pl.BlockSpec(shape, lambda b, t: (0, 0))

    # VMEM budget with headroom (sized so it also fits v7x's 64 MiB VMEM).
    io_bytes = tile_t * (C * 4 + S * 2 + 2 * C * 4)       # x + cond + res + skip
    w_bytes = (4 * C * C + 2 * C * S) * 2 + (2 * B * C + 2 * C) * 4
    vmem_limit = int(min(max(4 * (io_bytes + w_bytes), 8 << 20), 32 << 20))

    res_ct, skip_ct = pl.pallas_call(
        _residual_block_kernel,
        out_shape=(jax.ShapeDtypeStruct((B, C, T), jnp.float32),
                   jax.ShapeDtypeStruct((B, C, T), jnp.float32)),
        grid=(B, n_t),
        in_specs=[
            pl.BlockSpec((1, C, tile_t), lambda b, t: (b, 0, t)),    # x
            pl.BlockSpec((1, S, tile_t), lambda b, t: (b, 0, t)),    # cond
            full2d((C, C)), full2d((C, C)),                          # w_mid gate/filt
            full2d((C, S)), full2d((C, S)),                          # w_cond gate/filt
            full2d((C, C)), full2d((C, C)),                          # w_out res/skip
            pl.BlockSpec((1, C, 1), lambda b, t: (b, 0, 0)),         # b_gate (per-batch)
            pl.BlockSpec((1, C, 1), lambda b, t: (b, 0, 0)),         # b_filt (per-batch)
            full2d((C, 1)), full2d((C, 1)),                          # b_out res/skip
        ],
        out_specs=(pl.BlockSpec((1, C, tile_t), lambda b, t: (b, 0, t)),
                   pl.BlockSpec((1, C, tile_t), lambda b, t: (b, 0, t))),
        compiler_params=pltpu.CompilerParams(
            dimension_semantics=("parallel", "parallel"),
            vmem_limit_bytes=vmem_limit),
    )(x_ct, cond_ct,
      w_mid_g, w_mid_f, w_cond_g, w_cond_f, w_out_r, w_out_s,
      b_gate, b_filt, b_out_r, b_out_s)

    # ---- glue: back to (B, C, K, L) (reshape only) ----
    return res_ct.reshape(B, C, K, L), skip_ct.reshape(B, C, K, L)


# ----------------------------------------------------------------------------
# Pure-JAX f32 reference (mirrors the PyTorch forward with None time/spatial)
# ----------------------------------------------------------------------------
def residual_block_reference(x, cond_info, diffusion_emb, params):
    B, C, K, L = x.shape
    T = K * L
    x2 = x.reshape(B, C, T)
    dp = diffusion_emb @ params["w_diff"].T + params["b_diff"]       # (B, C)
    y = x2 + dp[:, :, None]
    mid = jnp.einsum("oc,bct->bot", params["w_mid"], y) + params["b_mid"][None, :, None]
    cond2 = cond_info.reshape(B, -1, T)
    cnd = jnp.einsum("os,bst->bot", params["w_cond"], cond2) + params["b_cond"][None, :, None]
    z = mid + cnd
    gate, filt = z[:, :C], z[:, C:]
    g = jax.nn.sigmoid(gate) * jnp.tanh(filt)
    out = jnp.einsum("oc,bct->bot", params["w_out"], g) + params["b_out"][None, :, None]
    residual, skip = out[:, :C], out[:, C:]
    res = (x2 + residual) / math.sqrt(2.0)
    return res.reshape(B, C, K, L), skip.reshape(B, C, K, L)


# ----------------------------------------------------------------------------
# Deterministic parameter init (shapes from ResidualBlock.__init__)
# ----------------------------------------------------------------------------
def init_params(key, side_dim, channels, diffusion_embedding_dim):
    ks = jax.random.split(key, 8)
    C, S, E = channels, side_dim, diffusion_embedding_dim

    def kaiming(k, out_c, in_c):
        std = math.sqrt(2.0 / in_c)  # kaiming_normal_, fan_in, kernel_size=1
        return std * jax.random.normal(k, (out_c, in_c), jnp.float32)

    def uniform(k, shape, fan_in):
        bound = 1.0 / math.sqrt(fan_in)
        return jax.random.uniform(k, shape, jnp.float32, -bound, bound)

    return {
        # nn.Linear(E, C)
        "w_diff": uniform(ks[0], (C, E), E),
        "b_diff": uniform(ks[1], (C,), E),
        # Conv1d_with_init(side_dim, 2C, 1)
        "w_cond": kaiming(ks[2], 2 * C, S),
        "b_cond": uniform(ks[3], (2 * C,), S),
        # Conv1d_with_init(C, 2C, 1)
        "w_mid": kaiming(ks[4], 2 * C, C),
        "b_mid": uniform(ks[5], (2 * C,), C),
        # Conv1d_with_init(C, 2C, 1)
        "w_out": kaiming(ks[6], 2 * C, C),
        "b_out": uniform(ks[7], (2 * C,), C),
    }


if __name__ == "__main__":
    B, C, K, L = 2, 8, 16, 16          # T = K*L = 256
    side_dim = 16
    diff_emb_dim = 32

    key = jax.random.PRNGKey(0)
    k1, k2, k3, kp = jax.random.split(key, 4)

    x = jax.random.normal(k1, (B, C, K, L), jnp.float32)
    cond_info = jax.random.normal(k2, (B, side_dim, K, L), jnp.float32)
    diffusion_emb = jax.random.normal(k3, (B, diff_emb_dim), jnp.float32)
    params = init_params(kp, side_dim, C, diff_emb_dim)

    # max_tile_t=128 -> T is split into 2 tiles per batch element (grid (2, 2)),
    # exercising the tiled / multi-block path.
    res, skip = residual_block_forward(x, cond_info, diffusion_emb, params,
                                       max_tile_t=128)
    jax.block_until_ready((res, skip))

    res_ref, skip_ref = residual_block_reference(x, cond_info, diffusion_emb, params)
    # bf16 matmuls with f32 accumulation -> loose-ish tolerances vs f32 reference.
    np.testing.assert_allclose(np.asarray(res), np.asarray(res_ref),
                               rtol=5e-2, atol=5e-2)
    np.testing.assert_allclose(np.asarray(skip), np.asarray(skip_ref),
                               rtol=5e-2, atol=5e-2)

    print("KERNEL_OK")
</pallas_src>

<mosaic_0001>
module attributes {stable_mosaic.version = 11 : i64} {
  func.func @_residual_block_kernel(%arg0: i32, %arg1: i32, %arg2: memref<1x8x128xf32, #tpu.memory_space<vmem>>, %arg3: memref<1x16x128xbf16, #tpu.memory_space<vmem>>, %arg4: memref<8x8xbf16, #tpu.memory_space<vmem>>, %arg5: memref<8x8xbf16, #tpu.memory_space<vmem>>, %arg6: memref<8x16xbf16, #tpu.memory_space<vmem>>, %arg7: memref<8x16xbf16, #tpu.memory_space<vmem>>, %arg8: memref<8x8xbf16, #tpu.memory_space<vmem>>, %arg9: memref<8x8xbf16, #tpu.memory_space<vmem>>, %arg10: memref<1x8x1xf32, #tpu.memory_space<vmem>>, %arg11: memref<1x8x1xf32, #tpu.memory_space<vmem>>, %arg12: memref<8x1xf32, #tpu.memory_space<vmem>>, %arg13: memref<8x1xf32, #tpu.memory_space<vmem>>, %arg14: memref<1x8x128xf32, #tpu.memory_space<vmem>>, %arg15: memref<1x8x128xf32, #tpu.memory_space<vmem>>) attributes {dimension_semantics = [#tpu.dimension_semantics<parallel>, #tpu.dimension_semantics<parallel>], iteration_bounds = array<i64: 2, 2>, scalar_prefetch = 0 : i64, scratch_operands = 0 : i64, tpu.core_type = #tpu.core_type<tc>, window_params = [{transform_indices = @transform_0, window_bounds = array<i64: 1, 8, 128>}, {transform_indices = @transform_1, window_bounds = array<i64: 1, 16, 128>}, {pipeline_mode = #tpu.pipeline_mode<synchronous>, transform_indices = @transform_2, window_bounds = array<i64: 8, 8>}, {pipeline_mode = #tpu.pipeline_mode<synchronous>, transform_indices = @transform_3, window_bounds = array<i64: 8, 8>}, {pipeline_mode = #tpu.pipeline_mode<synchronous>, transform_indices = @transform_4, window_bounds = array<i64: 8, 16>}, {pipeline_mode = #tpu.pipeline_mode<synchronous>, transform_indices = @transform_5, window_bounds = array<i64: 8, 16>}, {pipeline_mode = #tpu.pipeline_mode<synchronous>, transform_indices = @transform_6, window_bounds = array<i64: 8, 8>}, {pipeline_mode = #tpu.pipeline_mode<synchronous>, transform_indices = @transform_7, window_bounds = array<i64: 8, 8>}, {transform_indices = @transform_8, window_bounds = array<i64: 1, 8, 1>}, {transform_indices = @transform_9, window_bounds = array<i64: 1, 8, 1>}, {pipeline_mode = #tpu.pipeline_mode<synchronous>, transform_indices = @transform_10, window_bounds = array<i64: 8, 1>}, {pipeline_mode = #tpu.pipeline_mode<synchronous>, transform_indices = @transform_11, window_bounds = array<i64: 8, 1>}, {transform_indices = @transform_12, window_bounds = array<i64: 1, 8, 128>}, {transform_indices = @transform_13, window_bounds = array<i64: 1, 8, 128>}]} {
    %c0 = arith.constant 0 : index
    %c0_0 = arith.constant 0 : index
    %c0_1 = arith.constant 0 : index
    %0 = vector.load %arg2[%c0, %c0_0, %c0_1] : memref<1x8x128xf32, #tpu.memory_space<vmem>>, vector<1x8x128xf32>
    %1 = vector.shape_cast %0 : vector<1x8x128xf32> to vector<8x128xf32>
    %2 = arith.truncf %1 : vector<8x128xf32> to vector<8x128xbf16>
    %c0_2 = arith.constant 0 : index
    %c0_3 = arith.constant 0 : index
    %c0_4 = arith.constant 0 : index
    %3 = vector.load %arg3[%c0_2, %c0_3, %c0_4] : memref<1x16x128xbf16, #tpu.memory_space<vmem>>, vector<1x16x128xbf16>
    %4 = vector.shape_cast %3 : vector<1x16x128xbf16> to vector<16x128xbf16>
    %c0_5 = arith.constant 0 : index
    %c0_6 = arith.constant 0 : index
    %5 = vector.load %arg4[%c0_5, %c0_6] : memref<8x8xbf16, #tpu.memory_space<vmem>>, vector<8x8xbf16>
    %cst = arith.constant dense<0.000000e+00> : vector<8x128xf32>
    %6 = tpu.matmul %5, %2, %cst {dimension_numbers = #tpu.dot_dimension_numbers<[1], [0], [0], [1], [0, 0, 1, 1], [], []>} : vector<8x8xbf16>, vector<8x128xbf16>, vector<8x128xf32> -> vector<8x128xf32>
    %c0_7 = arith.constant 0 : index
    %c0_8 = arith.constant 0 : index
    %7 = vector.load %arg6[%c0_7, %c0_8] : memref<8x16xbf16, #tpu.memory_space<vmem>>, vector<8x16xbf16>
    %cst_9 = arith.constant dense<0.000000e+00> : vector<8x128xf32>
    %8 = tpu.matmul %7, %4, %cst_9 {dimension_numbers = #tpu.dot_dimension_numbers<[1], [0], [0], [1], [0, 0, 1, 1], [], []>} : vector<8x16xbf16>, vector<16x128xbf16>, vector<8x128xf32> -> vector<8x128xf32>
    %9 = arith.addf %6, %8 : vector<8x128xf32>
    %c0_10 = arith.constant 0 : index
    %c0_11 = arith.constant 0 : index
    %c0_12 = arith.constant 0 : index
    %10 = vector.load %arg10[%c0_10, %c0_11, %c0_12] : memref<1x8x1xf32, #tpu.memory_space<vmem>>, vector<1x8x1xf32>
    %11 = vector.shape_cast %10 : vector<1x8x1xf32> to vector<8x1xf32>
    %12 = vector.broadcast %11 : vector<8x1xf32> to vector<8x128xf32>
    %13 = arith.addf %9, %12 : vector<8x128xf32>
    %c0_13 = arith.constant 0 : index
    %c0_14 = arith.constant 0 : index
    %14 = vector.load %arg5[%c0_13, %c0_14] : memref<8x8xbf16, #tpu.memory_space<vmem>>, vector<8x8xbf16>
    %cst_15 = arith.constant dense<0.000000e+00> : vector<8x128xf32>
    %15 = tpu.matmul %14, %2, %cst_15 {dimension_numbers = #tpu.dot_dimension_numbers<[1], [0], [0], [1], [0, 0, 1, 1], [], []>} : vector<8x8xbf16>, vector<8x128xbf16>, vector<8x128xf32> -> vector<8x128xf32>
    %c0_16 = arith.constant 0 : index
    %c0_17 = arith.constant 0 : index
    %16 = vector.load %arg7[%c0_16, %c0_17] : memref<8x16xbf16, #tpu.memory_space<vmem>>, vector<8x16xbf16>
    %cst_18 = arith.constant dense<0.000000e+00> : vector<8x128xf32>
    %17 = tpu.matmul %16, %4, %cst_18 {dimension_numbers = #tpu.dot_dimension_numbers<[1], [0], [0], [1], [0, 0, 1, 1], [], []>} : vector<8x16xbf16>, vector<16x128xbf16>, vector<8x128xf32> -> vector<8x128xf32>
    %18 = arith.addf %15, %17 : vector<8x128xf32>
    %c0_19 = arith.constant 0 : index
    %c0_20 = arith.constant 0 : index
    %c0_21 = arith.constant 0 : index
    %19 = vector.load %arg11[%c0_19, %c0_20, %c0_21] : memref<1x8x1xf32, #tpu.memory_space<vmem>>, vector<1x8x1xf32>
    %20 = vector.shape_cast %19 : vector<1x8x1xf32> to vector<8x1xf32>
    %21 = vector.broadcast %20 : vector<8x1xf32> to vector<8x128xf32>
    %22 = arith.addf %18, %21 : vector<8x128xf32>
    %23 = arith.negf %13 : vector<8x128xf32>
    %24 = math.exp %23 : vector<8x128xf32>
    %cst_22 = arith.constant 1.000000e+00 : f32
    %25 = vector.broadcast %cst_22 : f32 to vector<8x128xf32>
    %26 = arith.addf %25, %24 : vector<8x128xf32>
    %27 = arith.divf %25, %26 : vector<8x128xf32>
    %28 = math.tanh %22 : vector<8x128xf32>
    %29 = arith.mulf %27, %28 : vector<8x128xf32>
    %30 = arith.truncf %29 : vector<8x128xf32> to vector<8x128xbf16>
    %c0_23 = arith.constant 0 : index
    %c0_24 = arith.constant 0 : index
    %31 = vector.load %arg8[%c0_23, %c0_24] : memref<8x8xbf16, #tpu.memory_space<vmem>>, vector<8x8xbf16>
    %cst_25 = arith.constant dense<0.000000e+00> : vector<8x128xf32>
    %32 = tpu.matmul %31, %30, %cst_25 {dimension_numbers = #tpu.dot_dimension_numbers<[1], [0], [0], [1], [0, 0, 1, 1], [], []>} : vector<8x8xbf16>, vector<8x128xbf16>, vector<8x128xf32> -> vector<8x128xf32>
    %c0_26 = arith.constant 0 : index
    %c0_27 = arith.constant 0 : index
    %33 = vector.load %arg12[%c0_26, %c0_27] : memref<8x1xf32, #tpu.memory_space<vmem>>, vector<8x1xf32>
    %34 = vector.broadcast %33 : vector<8x1xf32> to vector<8x128xf32>
    %35 = arith.addf %32, %34 : vector<8x128xf32>
    %c0_28 = arith.constant 0 : index
    %c0_29 = arith.constant 0 : index
    %36 = vector.load %arg9[%c0_28, %c0_29] : memref<8x8xbf16, #tpu.memory_space<vmem>>, vector<8x8xbf16>
    %cst_30 = arith.constant dense<0.000000e+00> : vector<8x128xf32>
    %37 = tpu.matmul %36, %30, %cst_30 {dimension_numbers = #tpu.dot_dimension_numbers<[1], [0], [0], [1], [0, 0, 1, 1], [], []>} : vector<8x8xbf16>, vector<8x128xbf16>, vector<8x128xf32> -> vector<8x128xf32>
    %c0_31 = arith.constant 0 : index
    %c0_32 = arith.constant 0 : index
    %38 = vector.load %arg13[%c0_31, %c0_32] : memref<8x1xf32, #tpu.memory_space<vmem>>, vector<8x1xf32>
    %39 = vector.broadcast %38 : vector<8x1xf32> to vector<8x128xf32>
    %40 = arith.addf %37, %39 : vector<8x128xf32>
    %41 = arith.addf %1, %35 : vector<8x128xf32>
    %cst_33 = arith.constant 0.707106769 : f32
    %42 = vector.broadcast %cst_33 : f32 to vector<8x128xf32>
    %43 = arith.mulf %41, %42 : vector<8x128xf32>
    %c0_34 = arith.constant 0 : index
    %c0_35 = arith.constant 0 : index
    %c0_36 = arith.constant 0 : index
    %44 = vector.load %arg14[%c0_34, %c0_35, %c0_36] : memref<1x8x128xf32, #tpu.memory_space<vmem>>, vector<1x8x128xf32>
    %45 = vector.shape_cast %44 : vector<1x8x128xf32> to vector<8x128xf32>
    %46 = vector.shape_cast %43 : vector<8x128xf32> to vector<1x8x128xf32>
    tpu.vector_store %arg14[%c0_34, %c0_35, %c0_36], %46 {strides = array<i32>} : memref<1x8x128xf32, #tpu.memory_space<vmem>>, vector<1x8x128xf32>,
    %c0_37 = arith.constant 0 : index
    %c0_38 = arith.constant 0 : index
    %c0_39 = arith.constant 0 : index
    %47 = vector.load %arg15[%c0_37, %c0_38, %c0_39] : memref<1x8x128xf32, #tpu.memory_space<vmem>>, vector<1x8x128xf32>
    %48 = vector.shape_cast %47 : vector<1x8x128xf32> to vector<8x128xf32>
    %49 = vector.shape_cast %40 : vector<8x128xf32> to vector<1x8x128xf32>
    tpu.vector_store %arg15[%c0_37, %c0_38, %c0_39], %49 {strides = array<i32>} : memref<1x8x128xf32, #tpu.memory_space<vmem>>, vector<1x8x128xf32>,
    return
  }
  func.func @transform_0(%arg0: i32, %arg1: i32) -> (i32, i32, i32) {
    %c0_i32 = arith.constant 0 : i32
    %c0_i32_0 = arith.constant 0 : i32
    return %arg0, %c0_i32, %arg1 : i32, i32, i32
  }
  func.func @transform_1(%arg0: i32, %arg1: i32) -> (i32, i32, i32) {
    %c0_i32 = arith.constant 0 : i32
    %c0_i32_0 = arith.constant 0 : i32
    return %arg0, %c0_i32, %arg1 : i32, i32, i32
  }
  func.func @transform_2(%arg0: i32, %arg1: i32) -> (i32, i32) {
    %c0_i32 = arith.constant 0 : i32
    %c0_i32_0 = arith.constant 0 : i32
    %c0_i32_1 = arith.constant 0 : i32
    return %c0_i32, %c0_i32_0 : i32, i32
  }
  func.func @transform_3(%arg0: i32, %arg1: i32) -> (i32, i32) {
    %c0_i32 = arith.constant 0 : i32
    %c0_i32_0 = arith.constant 0 : i32
    %c0_i32_1 = arith.constant 0 : i32
    return %c0_i32, %c0_i32_0 : i32, i32
  }
  func.func @transform_4(%arg0: i32, %arg1: i32) -> (i32, i32) {
    %c0_i32 = arith.constant 0 : i32
    %c0_i32_0 = arith.constant 0 : i32
    %c0_i32_1 = arith.constant 0 : i32
    return %c0_i32, %c0_i32_0 : i32, i32
  }
  func.func @transform_5(%arg0: i32, %arg1: i32) -> (i32, i32) {
    %c0_i32 = arith.constant 0 : i32
    %c0_i32_0 = arith.constant 0 : i32
    %c0_i32_1 = arith.constant 0 : i32
    return %c0_i32, %c0_i32_0 : i32, i32
  }
  func.func @transform_6(%arg0: i32, %arg1: i32) -> (i32, i32) {
    %c0_i32 = arith.constant 0 : i32
    %c0_i32_0 = arith.constant 0 : i32
    %c0_i32_1 = arith.constant 0 : i32
    return %c0_i32, %c0_i32_0 : i32, i32
  }
  func.func @transform_7(%arg0: i32, %arg1: i32) -> (i32, i32) {
    %c0_i32 = arith.constant 0 : i32
    %c0_i32_0 = arith.constant 0 : i32
    %c0_i32_1 = arith.constant 0 : i32
    return %c0_i32, %c0_i32_0 : i32, i32
  }
  func.func @transform_8(%arg0: i32, %arg1: i32) -> (i32, i32, i32) {
    %c0_i32 = arith.constant 0 : i32
    %c0_i32_0 = arith.constant 0 : i32
    %c0_i32_1 = arith.constant 0 : i32
    return %arg0, %c0_i32, %c0_i32_0 : i32, i32, i32
  }
  func.func @transform_9(%arg0: i32, %arg1: i32) -> (i32, i32, i32) {
    %c0_i32 = arith.constant 0 : i32
    %c0_i32_0 = arith.constant 0 : i32
    %c0_i32_1 = arith.constant 0 : i32
    return %arg0, %c0_i32, %c0_i32_0 : i32, i32, i32
  }
  func.func @transform_10(%arg0: i32, %arg1: i32) -> (i32, i32) {
    %c0_i32 = arith.constant 0 : i32
    %c0_i32_0 = arith.constant 0 : i32
    %c0_i32_1 = arith.constant 0 : i32
    return %c0_i32, %c0_i32_0 : i32, i32
  }
  func.func @transform_11(%arg0: i32, %arg1: i32) -> (i32, i32) {
    %c0_i32 = arith.constant 0 : i32
    %c0_i32_0 = arith.constant 0 : i32
    %c0_i32_1 = arith.constant 0 : i32
    return %c0_i32, %c0_i32_0 : i32, i32
  }
  func.func @transform_12(%arg0: i32, %arg1: i32) -> (i32, i32, i32) {
    %c0_i32 = arith.constant 0 : i32
    %c0_i32_0 = arith.constant 0 : i32
    return %arg0, %c0_i32, %arg1 : i32, i32, i32
  }
  func.func @transform_13(%arg0: i32, %arg1: i32) -> (i32, i32, i32) {
    %c0_i32 = arith.constant 0 : i32
    %c0_i32_0 = arith.constant 0 : i32
    return %arg0, %c0_i32, %arg1 : i32, i32, i32
  }
}

</mosaic_0001>

<llo_original>
// kernel: tpu_custom_call.1
$region0: #{tpu_custom_call.1}
  #allocation0 [shape = 'u32[]', space=smem, size = 0x4, offset = 0x4, fixed_abs, tag = 'smem constant byte address 0x4 - core index']
  #allocation1 [shape = 'u32[144,128]{1,0:T(1,128)}', space=vmem, size = 0x12000, scoped, tag = 'internal scratch']
  %s0 = inlined_call_operand.vmem [shape: f32[2,8,256], index: 0, kind: input, shape index: {}]
  %s1 = inlined_call_operand.hbm [shape: bf16[2,16,256], index: 1, kind: input, shape index: {}]
  %s2 = inlined_call_operand.vmem [shape: bf16[8,8], index: 2, kind: input, shape index: {}]
  %s3 = inlined_call_operand.vmem [shape: bf16[8,8], index: 3, kind: input, shape index: {}]
  %s4 = inlined_call_operand.vmem [shape: bf16[8,16], index: 4, kind: input, shape index: {}]
  %s5 = inlined_call_operand.vmem [shape: bf16[8,16], index: 5, kind: input, shape index: {}]
  %s6 = inlined_call_operand.vmem [shape: bf16[8,8], index: 6, kind: input, shape index: {}]
  %s7 = inlined_call_operand.vmem [shape: bf16[8,8], index: 7, kind: input, shape index: {}]
  %s8 = inlined_call_operand.vmem [shape: f32[2,8,1], index: 8, kind: input, shape index: {}]
  %s9 = inlined_call_operand.vmem [shape: f32[2,8,1], index: 9, kind: input, shape index: {}]
  %s10 = inlined_call_operand.vmem [shape: f32[8,1], index: 10, kind: input, shape index: {}]
  %s11 = inlined_call_operand.vmem [shape: f32[8,1], index: 11, kind: input, shape index: {}]
  %s12 = inlined_call_operand.hbm [shape: f32[2,8,256], index: 12, kind: output, shape index: {0}]
  %s13 = inlined_call_operand.hbm [shape: f32[2,8,256], index: 13, kind: output, shape index: {1}]
  %14 = xla_tuple %s12, %s13
  %s15 = sld [smem:[#allocation0]]
  $region93: #{tpu_custom_call.1} parent=0
    _
  %s17 = ssub.s32 1, %s15
  %s18 = scalar_select 0, %s17, %s15
  $region1: #{tpu_custom_call.1} parent=0
    #allocation2 [shape = 'u8[8192]{0}', space=vmem, size = 0x2000, scoped, tag = 'input window, operand 1']
    #allocation3 [shape = 's32[2]{0}', space=sflag, size = 0x8, scoped, tag = 'scoped memory for tpu_custom_call.1']
    #allocation4 [shape = 's32[2]{0}', space=sflag, size = 0x8, scoped, tag = 'scoped memory for tpu_custom_call.1']
    #allocation5 [shape = 'u8[8192]{0}', space=vmem, size = 0x2000, scoped, tag = 'output window, operand 0']
    #allocation6 [shape = 'u8[8192]{0}', space=vmem, size = 0x2000, scoped, tag = 'output window, operand 1']
    #allocation7 [shape = 's32[2]{0}', space=sflag, size = 0x8, scoped, tag = 'scoped memory for tpu_custom_call.1']
    %19 = vsyncpa [#allocation3], 0
    %s20 = scalar_lea.sflag [#allocation3], 1
    %21 = vsyncpa %s20, 0
    %22 = vsyncpa [#allocation4], 0
    %s23 = scalar_lea.sflag [#allocation4], 1
    %24 = vsyncpa %s23, 0
    %25 = vsyncpa [#allocation7], 0
    %s26 = scalar_lea.sflag [#allocation7], 1
    %27 = vsyncpa %s26, 0
    loop: start=0, step=1, limit=6
    $region2: #{tpu_custom_call.1} parent=1 // loop_pre_header
      _
    $region3: #{tpu_custom_call.1} parent=1 // loop_header
      %s29 = sphi 0, %s33
      %p30 = scmp.ge.s32.totalorder %s29, 6
      %s36 = sphi 0, %s48
      %s37 = sphi 0, %s44
      %s38 = sphi 0, %s36
      %s39 = sphi 0, %s37
      %s40 = sphi 0, %s38
      %s41 = sphi 0, %s39
      %s53 = sphi 0, %s55
      %s56 = sphi 0, %s53
      %s57 = sphi 0, %s56
      %s73 = sphi 0, %s57
      %s81 = sphi 0, %s83
      %s84 = sphi 0, %s81
      %s85 = sphi 0, %s84
      %s101 = sphi 0, %s85
      %s105 = sphi 0, %s105
      %s107 = sphi 0, %s105
      %s108 = sphi 0, %s107
      %s122 = sphi 0, %s108
      %s126 = sphi 0, %s126
      %s128 = sphi 0, %s126
      %s129 = sphi 0, %s128
      %s143 = sphi 0, %s129
      %s147 = sphi 0, %s147
      %s149 = sphi 0, %s147
      %s150 = sphi 0, %s149
      %s164 = sphi 0, %s150
      %s168 = sphi 0, %s168
      %s170 = sphi 0, %s168
      %s171 = sphi 0, %s170
      %s185 = sphi 0, %s171
      %s189 = sphi 0, %s189
      %s191 = sphi 0, %s189
      %s192 = sphi 0, %s191
      %s206 = sphi 0, %s192
      %s210 = sphi 0, %s210
      %s212 = sphi 0, %s210
      %s213 = sphi 0, %s212
      %s227 = sphi 0, %s213
      %s233 = sphi 0, %s235
      %s236 = sphi 0, %s233
      %s237 = sphi 0, %s236
      %s253 = sphi 0, %s237
      %s259 = sphi 0, %s261
      %s262 = sphi 0, %s259
      %s263 = sphi 0, %s262
      %s279 = sphi 0, %s263
      %s283 = sphi 0, %s283
      %s285 = sphi 0, %s283
      %s286 = sphi 0, %s285
      %s300 = sphi 0, %s286
      %s304 = sphi 0, %s304
      %s306 = sphi 0, %s304
      %s307 = sphi 0, %s306
      %s321 = sphi 0, %s307
      %s329 = sphi 0, %s331
      %s332 = sphi 0, %s329
      %s333 = sphi 0, %s332
      %s349 = sphi 0, %s333
      %s357 = sphi 0, %s359
      %s360 = sphi 0, %s357
      %s361 = sphi 0, %s360
      %s377 = sphi 0, %s361
    $region4: #{tpu_custom_call.1} parent=1 // loop_header_branch
      %32 = sbr.rel (%p30) target = $region8
    $region5: #{tpu_custom_call.1} parent=1 // loop_body
      %s34 = ssub.s32 %s29, 1
      %s35 = ssub.s32 %s29, 2
      %s42 = sadd.s32 1, %s37
      %p43 = scmp.ge.s32.totalorder %s42, 2
      %s44 = scalar_select %p43, 0, %s42
      %s45 = sadd.s32 1, %s36
      %s46 = scalar_select %p43, %s45, %s36
      %p47 = scmp.ge.s32.totalorder %s46, 2
      %s48 = scalar_select %p47, 0, %s46
      %s49 = ssub.s32 %s36, %s48
      %s50 = ssub.s32 %s37, %s44
      %s51 = sor.u32 %s49, %s50
      %p52 = scmp.eq.s32.totalorder %s51, 0
      %s54 = sadd.s32 %s53, 1
      %s55 = scalar_select %p52, %s53, %s54
      %p58 = pneg %p52
      %p59 = scmp.eq.s32.totalorder %s29, 3
      %p60 = por %p58, %p59
      %p61 = scmp.ne.s32.totalorder %s53, %s56
      %p62 = scmp.eq.s32.totalorder %s29, 0
      %p63 = por %p61, %p62
      %p64 = scmp.ne.s32.totalorder %s53, %s56
      %p65 = scmp.eq.s32.totalorder %s34, 3
      %p66 = por %p64, %p65
      %p67 = scmp.ne.s32.totalorder %s56, %s57
      %p68 = scmp.eq.s32.totalorder %s34, 0
      %p69 = por %p67, %p68
      %p70 = scmp.ne.s32.totalorder %s56, %s57
      %p71 = scmp.eq.s32.totalorder %s35, 3
      %p72 = por %p70, %p71
      %p74 = scmp.ne.s32.totalorder %s57, %s73
      %p75 = scmp.eq.s32.totalorder %s35, 0
      %p76 = por %p74, %p75
      %s77 = ssub.s32 %s36, %s48
      %s78 = ssub.s32 %s37, %s44
      %s79 = sor.u32 %s77, %s78
      %p80 = scmp.eq.s32.totalorder %s79, 0
      %s82 = sadd.s32 %s81, 1
      %s83 = scalar_select %p80, %s81, %s82
      %p86 = pneg %p80
      %p87 = scmp.eq.s32.totalorder %s29, 3
      %p88 = por %p86, %p87
      %p89 = scmp.ne.s32.totalorder %s81, %s84
      %p90 = scmp.eq.s32.totalorder %s29, 0
      %p91 = por %p89, %p90
      %p92 = scmp.ne.s32.totalorder %s81, %s84
      %p93 = scmp.eq.s32.totalorder %s34, 3
      %p94 = por %p92, %p93
      %p95 = scmp.ne.s32.totalorder %s84, %s85
      %p96 = scmp.eq.s32.totalorder %s34, 0
      %p97 = por %p95, %p96
      %p98 = scmp.ne.s32.totalorder %s84, %s85
      %p99 = scmp.eq.s32.totalorder %s35, 3
      %p100 = por %p98, %p99
      %p102 = scmp.ne.s32.totalorder %s85, %s101
      %p103 = scmp.eq.s32.totalorder %s35, 0
      %p104 = por %p102, %p103
      %s106 = sadd.s32 %s105, 1
      %p109 = scmp.eq.s32.totalorder %s29, 3
      %p110 = scmp.ne.s32.totalorder %s105, %s107
      %p111 = scmp.eq.s32.totalorder %s29, 0
      %p112 = por %p110, %p111
      %p113 = scmp.ne.s32.totalorder %s105, %s107
      %p114 = scmp.eq.s32.totalorder %s34, 3
      %p115 = por %p113, %p114
      %p116 = scmp.ne.s32.totalorder %s107, %s108
      %p117 = scmp.eq.s32.totalorder %s34, 0
      %p118 = por %p116, %p117
      %p119 = scmp.ne.s32.totalorder %s107, %s108
      %p120 = scmp.eq.s32.totalorder %s35, 3
      %p121 = por %p119, %p120
      %p123 = scmp.ne.s32.totalorder %s108, %s122
      %p124 = scmp.eq.s32.totalorder %s35, 0
      %p125 = por %p123, %p124
      %s127 = sadd.s32 %s126, 1
      %p130 = scmp.eq.s32.totalorder %s29, 3
      %p131 = scmp.ne.s32.totalorder %s126, %s128
      %p132 = scmp.eq.s32.totalorder %s29, 0
      %p133 = por %p131, %p132
      %p134 = scmp.ne.s32.totalorder %s126, %s128
      %p135 = scmp.eq.s32.totalorder %s34, 3
      %p136 = por %p134, %p135
      %p137 = scmp.ne.s32.totalorder %s128, %s129
      %p138 = scmp.eq.s32.totalorder %s34, 0
      %p139 = por %p137, %p138
      %p140 = scmp.ne.s32.totalorder %s128, %s129
      %p141 = scmp.eq.s32.totalorder %s35, 3
      %p142 = por %p140, %p141
      %p144 = scmp.ne.s32.totalorder %s129, %s143
      %p145 = scmp.eq.s32.totalorder %s35, 0
      %p146 = por %p144, %p145
      %s148 = sadd.s32 %s147, 1
      %p151 = scmp.eq.s32.totalorder %s29, 3
      %p152 = scmp.ne.s32.totalorder %s147, %s149
      %p153 = scmp.eq.s32.totalorder %s29, 0
      %p154 = por %p152, %p153
      %p155 = scmp.ne.s32.totalorder %s147, %s149
      %p156 = scmp.eq.s32.totalorder %s34, 3
      %p157 = por %p155, %p156
      %p158 = scmp.ne.s32.totalorder %s149, %s150
      %p159 = scmp.eq.s32.totalorder %s34, 0
      %p160 = por %p158, %p159
      %p161 = scmp.ne.s32.totalorder %s149, %s150
      %p162 = scmp.eq.s32.totalorder %s35, 3
      %p163 = por %p161, %p162
      %p165 = scmp.ne.s32.totalorder %s150, %s164
      %p166 = scmp.eq.s32.totalorder %s35, 0
      %p167 = por %p165, %p166
      %s169 = sadd.s32 %s168, 1
      %p172 = scmp.eq.s32.totalorder %s29, 3
      %p173 = scmp.ne.s32.totalorder %s168, %s170
      %p174 = scmp.eq.s32.totalorder %s29, 0
      %p175 = por %p173, %p174
      %p176 = scmp.ne.s32.totalorder %s168, %s170
      %p177 = scmp.eq.s32.totalorder %s34, 3
      %p178 = por %p176, %p177
      %p179 = scmp.ne.s32.totalorder %s170, %s171
      %p180 = scmp.eq.s32.totalorder %s34, 0
      %p181 = por %p179, %p180
      %p182 = scmp.ne.s32.totalorder %s170, %s171
      %p183 = scmp.eq.s32.totalorder %s35, 3
      %p184 = por %p182, %p183
      %p186 = scmp.ne.s32.totalorder %s171, %s185
      %p187 = scmp.eq.s32.totalorder %s35, 0
      %p188 = por %p186, %p187
      %s190 = sadd.s32 %s189, 1
      %p193 = scmp.eq.s32.totalorder %s29, 3
      %p194 = scmp.ne.s32.totalorder %s189, %s191
      %p195 = scmp.eq.s32.totalorder %s29, 0
      %p196 = por %p194, %p195
      %p197 = scmp.ne.s32.totalorder %s189, %s191
      %p198 = scmp.eq.s32.totalorder %s34, 3
      %p199 = por %p197, %p198
      %p200 = scmp.ne.s32.totalorder %s191, %s192
      %p201 = scmp.eq.s32.totalorder %s34, 0
      %p202 = por %p200, %p201
      %p203 = scmp.ne.s32.totalorder %s191, %s192
      %p204 = scmp.eq.s32.totalorder %s35, 3
      %p205 = por %p203, %p204
      %p207 = scmp.ne.s32.totalorder %s192, %s206
      %p208 = scmp.eq.s32.totalorder %s35, 0
      %p209 = por %p207, %p208
      %s211 = sadd.s32 %s210, 1
      %p214 = scmp.eq.s32.totalorder %s29, 3
      %p215 = scmp.ne.s32.totalorder %s210, %s212
      %p216 = scmp.eq.s32.totalorder %s29, 0
      %p217 = por %p215, %p216
      %p218 = scmp.ne.s32.totalorder %s210, %s212
      %p219 = scmp.eq.s32.totalorder %s34, 3
      %p220 = por %p218, %p219
      %p221 = scmp.ne.s32.totalorder %s212, %s213
      %p222 = scmp.eq.s32.totalorder %s34, 0
      %p223 = por %p221, %p222
      %p224 = scmp.ne.s32.totalorder %s212, %s213
      %p225 = scmp.eq.s32.totalorder %s35, 3
      %p226 = por %p224, %p225
      %p228 = scmp.ne.s32.totalorder %s213, %s227
      %p229 = scmp.eq.s32.totalorder %s35, 0
      %p230 = por %p228, %p229
      %s231 = ssub.s32 %s36, %s48
      %p232 = scmp.eq.s32.totalorder %s231, 0
      %s234 = sadd.s32 %s233, 1
      %s235 = scalar_select %p232, %s233, %s234
      %p238 = pneg %p232
      %p239 = scmp.eq.s32.totalorder %s29, 3
      %p240 = por %p238, %p239
      %p241 = scmp.ne.s32.totalorder %s233, %s236
      %p242 = scmp.eq.s32.totalorder %s29, 0
      %p243 = por %p241, %p242
      %p244 = scmp.ne.s32.totalorder %s233, %s236
      %p245 = scmp.eq.s32.totalorder %s34, 3
      %p246 = por %p244, %p245
      %p247 = scmp.ne.s32.totalorder %s236, %s237
      %p248 = scmp.eq.s32.totalorder %s34, 0
      %p249 = por %p247, %p248
      %p250 = scmp.ne.s32.totalorder %s236, %s237
      %p251 = scmp.eq.s32.totalorder %s35, 3
      %p252 = por %p250, %p251
      %p254 = scmp.ne.s32.totalorder %s237, %s253
      %p255 = scmp.eq.s32.totalorder %s35, 0
      %p256 = por %p254, %p255
      %s257 = ssub.s32 %s36, %s48
      %p258 = scmp.eq.s32.totalorder %s257, 0
      %s260 = sadd.s32 %s259, 1
      %s261 = scalar_select %p258, %s259, %s260
      %p264 = pneg %p258
      %p265 = scmp.eq.s32.totalorder %s29, 3
      %p266 = por %p264, %p265
      %p267 = scmp.ne.s32.totalorder %s259, %s262
      %p268 = scmp.eq.s32.totalorder %s29, 0
      %p269 = por %p267, %p268
      %p270 = scmp.ne.s32.totalorder %s259, %s262
      %p271 = scmp.eq.s32.totalorder %s34, 3
      %p272 = por %p270, %p271
      %p273 = scmp.ne.s32.totalorder %s262, %s263
      %p274 = scmp.eq.s32.totalorder %s34, 0
      %p275 = por %p273, %p274
      %p276 = scmp.ne.s32.totalorder %s262, %s263
      %p277 = scmp.eq.s32.totalorder %s35, 3
      %p278 = por %p276, %p277
      %p280 = scmp.ne.s32.totalorder %s263, %s279
      %p281 = scmp.eq.s32.totalorder %s35, 0
      %p282 = por %p280, %p281
      %s284 = sadd.s32 %s283, 1
      %p287 = scmp.eq.s32.totalorder %s29, 3
      %p288 = scmp.ne.s32.totalorder %s283, %s285
      %p289 = scmp.eq.s32.totalorder %s29, 0
      %p290 = por %p288, %p289
      %p291 = scmp.ne.s32.totalorder %s283, %s285
      %p292 = scmp.eq.s32.totalorder %s34, 3
      %p293 = por %p291, %p292
      %p294 = scmp.ne.s32.totalorder %s285, %s286
      %p295 = scmp.eq.s32.totalorder %s34, 0
      %p296 = por %p294, %p295
      %p297 = scmp.ne.s32.totalorder %s285, %s286
      %p298 = scmp.eq.s32.totalorder %s35, 3
      %p299 = por %p297, %p298
      %p301 = scmp.ne.s32.totalorder %s286, %s300
      %p302 = scmp.eq.s32.totalorder %s35, 0
      %p303 = por %p301, %p302
      %s305 = sadd.s32 %s304, 1
      %p308 = scmp.eq.s32.totalorder %s29, 3
      %p309 = scmp.ne.s32.totalorder %s304, %s306
      %p310 = scmp.eq.s32.totalorder %s29, 0
      %p311 = por %p309, %p310
      %p312 = scmp.ne.s32.totalorder %s304, %s306
      %p313 = scmp.eq.s32.totalorder %s34, 3
      %p314 = por %p312, %p313
      %p315 = scmp.ne.s32.totalorder %s306, %s307
      %p316 = scmp.eq.s32.totalorder %s34, 0
      %p317 = por %p315, %p316
      %p318 = scmp.ne.s32.totalorder %s306, %s307
      %p319 = scmp.eq.s32.totalorder %s35, 3
      %p320 = por %p318, %p319
      %p322 = scmp.ne.s32.totalorder %s307, %s321
      %p323 = scmp.eq.s32.totalorder %s35, 0
      %p324 = por %p322, %p323
      %s325 = ssub.s32 %s36, %s48
      %s326 = ssub.s32 %s37, %s44
      %s327 = sor.u32 %s325, %s326
      %p328 = scmp.eq.s32.totalorder %s327, 0
      %s330 = sadd.s32 %s329, 1
      %s331 = scalar_select %p328, %s329, %s330
      %p334 = pneg %p328
      %p335 = scmp.eq.s32.totalorder %s29, 3
      %p336 = por %p334, %p335
      %p337 = scmp.ne.s32.totalorder %s329, %s332
      %p338 = scmp.eq.s32.totalorder %s29, 0
      %p339 = por %p337, %p338
      %p340 = scmp.ne.s32.totalorder %s329, %s332
      %p341 = scmp.eq.s32.totalorder %s34, 3
      %p342 = por %p340, %p341
      %p343 = scmp.ne.s32.totalorder %s332, %s333
      %p344 = scmp.eq.s32.totalorder %s34, 0
      %p345 = por %p343, %p344
      %p346 = scmp.ne.s32.totalorder %s332, %s333
      %p347 = scmp.eq.s32.totalorder %s35, 3
      %p348 = por %p346, %p347
      %p350 = scmp.ne.s32.totalorder %s333, %s349
      %p351 = scmp.eq.s32.totalorder %s35, 0
      %p352 = por %p350, %p351
      %s353 = ssub.s32 %s36, %s48
      %s354 = ssub.s32 %s37, %s44
      %s355 = sor.u32 %s353, %s354
      %p356 = scmp.eq.s32.totalorder %s355, 0
      %s358 = sadd.s32 %s357, 1
      %s359 = scalar_select %p356, %s357, %s358
      %p362 = pneg %p356
      %p363 = scmp.eq.s32.totalorder %s29, 3
      %p364 = por %p362, %p363
      %p365 = scmp.ne.s32.totalorder %s357, %s360
      %p366 = scmp.eq.s32.totalorder %s29, 0
      %p367 = por %p365, %p366
      %p368 = scmp.ne.s32.totalorder %s357, %s360
      %p369 = scmp.eq.s32.totalorder %s34, 3
      %p370 = por %p368, %p369
      %p371 = scmp.ne.s32.totalorder %s360, %s361
      %p372 = scmp.eq.s32.totalorder %s34, 0
      %p373 = por %p371, %p372
      %p374 = scmp.ne.s32.totalorder %s360, %s361
      %p375 = scmp.eq.s32.totalorder %s35, 3
      %p376 = por %p374, %p375
      %p378 = scmp.ne.s32.totalorder %s361, %s377
      %p379 = scmp.eq.s32.totalorder %s35, 0
      %p380 = por %p378, %p379
      %p381 = scmp.le.s32.totalorder 1, %s29
      %p382 = scmp.lt.s32.totalorder %s29, 5
      %p383 = pnand %p381, %p382
      %p384 = pneg %p383
      // Predicated region
      $region9: #{tpu_custom_call.1} parent=5 // pred_check
        _
      $region10: #{tpu_custom_call.1} parent=5 // pred_check_branch
        %386 = sbr.rel (%p383) target = $region12
      $region11: #{tpu_custom_call.1} parent=5 // pred_region
        %s387 = ssub.s32 %s29, 1
        // Predicated region
        $region13: #{tpu_custom_call.1} parent=11 // pred_check
          %p388 = pneg %p118
        $region14: #{tpu_custom_call.1} parent=11 // pred_check_branch
          %390 = sbr.rel (%p388) target = $region16
        $region15: #{tpu_custom_call.1} parent=11 // pred_region
          _
        $region16: #{tpu_custom_call.1} parent=11 // pred_fallthru
          _
        // Predicated region
        $region17: #{tpu_custom_call.1} parent=11 // pred_check
          %p391 = pneg %p139
        $region18: #{tpu_custom_call.1} parent=11 // pred_check_branch
          %393 = sbr.rel (%p391) target = $region20
        $region19: #{tpu_custom_call.1} parent=11 // pred_region
          _
        $region20: #{tpu_custom_call.1} parent=11 // pred_fallthru
          _
        // Predicated region
        $region21: #{tpu_custom_call.1} parent=11 // pred_check
          %p394 = pneg %p160
        $region22: #{tpu_custom_call.1} parent=11 // pred_check_branch
          %396 = sbr.rel (%p394) target = $region24
        $region23: #{tpu_custom_call.1} parent=11 // pred_region
          _
        $region24: #{tpu_custom_call.1} parent=11 // pred_fallthru
          _
        // Predicated region
        $region25: #{tpu_custom_call.1} parent=11 // pred_check
          %p397 = pneg %p181
        $region26: #{tpu_custom_call.1} parent=11 // pred_check_branch
          %399 = sbr.rel (%p397) target = $region28
        $region27: #{tpu_custom_call.1} parent=11 // pred_region
          _
        $region28: #{tpu_custom_call.1} parent=11 // pred_fallthru
          _
        // Predicated region
        $region29: #{tpu_custom_call.1} parent=11 // pred_check
          %p400 = pneg %p202
        $region30: #{tpu_custom_call.1} parent=11 // pred_check_branch
          %402 = sbr.rel (%p400) target = $region32
        $region31: #{tpu_custom_call.1} parent=11 // pred_region
          _
        $region32: #{tpu_custom_call.1} parent=11 // pred_fallthru
          _
        // Predicated region
        $region33: #{tpu_custom_call.1} parent=11 // pred_check
          %p403 = pneg %p223
        $region34: #{tpu_custom_call.1} parent=11 // pred_check_branch
          %405 = sbr.rel (%p403) target = $region36
        $region35: #{tpu_custom_call.1} parent=11 // pred_region
          _
        $region36: #{tpu_custom_call.1} parent=11 // pred_fallthru
          _
        // Predicated region
        $region37: #{tpu_custom_call.1} parent=11 // pred_check
          %p406 = pneg %p296
        $region38: #{tpu_custom_call.1} parent=11 // pred_check_branch
          %408 = sbr.rel (%p406) target = $region40
        $region39: #{tpu_custom_call.1} parent=11 // pred_region
          _
        $region40: #{tpu_custom_call.1} parent=11 // pred_fallthru
          _
        // Predicated region
        $region41: #{tpu_custom_call.1} parent=11 // pred_check
          %p409 = pneg %p317
        $region42: #{tpu_custom_call.1} parent=11 // pred_check_branch
          %411 = sbr.rel (%p409) target = $region44
        $region43: #{tpu_custom_call.1} parent=11 // pred_region
          _
        $region44: #{tpu_custom_call.1} parent=11 // pred_fallthru
          _
      $region12: #{tpu_custom_call.1} parent=5 // pred_fallthru
        _
      %p412 = scmp.lt.s32.totalorder %s29, 4
      // Predicated region
      $region45: #{tpu_custom_call.1} parent=5 // pred_check
        %p413 = pneg %p412
      $region46: #{tpu_custom_call.1} parent=5 // pred_check_branch
        %415 = sbr.rel (%p413) target = $region48
      $region47: #{tpu_custom_call.1} parent=5 // pred_region
        // Predicated region
        $region49: #{tpu_custom_call.1} parent=47 // pred_check
          %p416 = pneg %p63
        $region50: #{tpu_custom_call.1} parent=47 // pred_check_branch
          %418 = sbr.rel (%p416) target = $region52
        $region51: #{tpu_custom_call.1} parent=47 // pred_region
          %p419 = scmp.lt.s32.totalorder %s36, 1
          %s420 = scalar_select %p419, %s36, 1
          %p421 = scmp.lt.s32.totalorder %s37, 1
          %s422 = scalar_select %p421, %s37, 1
          %s423 = smul.addr %s420, 2
          %s424 = sadd.s32 %s422, %s423
          %s425 = smul.addr %s424, 8
          %s426 = scalar_lea.vmem %s0, %s425
        $region52: #{tpu_custom_call.1} parent=47 // pred_fallthru
          _
        // Predicated region
        $region53: #{tpu_custom_call.1} parent=47 // pred_check
          %p427 = pneg %p91
        $region54: #{tpu_custom_call.1} parent=47 // pred_check_branch
          %429 = sbr.rel (%p427) target = $region56
        $region55: #{tpu_custom_call.1} parent=47 // pred_region
          %s430 = sand.u32 %s81, 1
          %s431 = scalar_lea.sflag [#allocation3], %s430
          %s432 = sand.u32 %s81, 1
          %s433 = smul.addr %s432, 8
          %s434 = scalar_lea.vmem [#allocation2], %s433
          %s436 = ssub.s32 128, 128
          %437 = vsyncadd %s431, %s436
          %s438 = smul.addr %s36, 4
          %s439 = sadd.s32 %s37, %s438
          %s440 = smul.addr %s439, 64
          %s441 = scalar_lea.hbm %s1, %s440
          %s442 = sshll.u32 %s434, 4
          %s443 = int_to_ptr.vmem [resolvable:$true] %s442
          %448 = dma.hbm_to_vmem [thread:$0]  %s441, 128, %s443, %s431, 128, 64, 4
        $region56: #{tpu_custom_call.1} parent=47 // pred_fallthru
          _
        // Predicated region
        $region57: #{tpu_custom_call.1} parent=47 // pred_check
          %p449 = pneg %p243
        $region58: #{tpu_custom_call.1} parent=47 // pred_check_branch
          %451 = sbr.rel (%p449) target = $region60
        $region59: #{tpu_custom_call.1} parent=47 // pred_region
          %p452 = scmp.lt.s32.totalorder %s36, 1
          %s453 = scalar_select %p452, %s36, 1
          %s454 = smul.addr %s453, 8
          %s455 = scalar_lea.vmem %s8, %s454
        $region60: #{tpu_custom_call.1} parent=47 // pred_fallthru
          _
        // Predicated region
        $region61: #{tpu_custom_call.1} parent=47 // pred_check
          %p456 = pneg %p269
        $region62: #{tpu_custom_call.1} parent=47 // pred_check_branch
          %458 = sbr.rel (%p456) target = $region64
        $region63: #{tpu_custom_call.1} parent=47 // pred_region
          %p459 = scmp.lt.s32.totalorder %s36, 1
          %s460 = scalar_select %p459, %s36, 1
          %s461 = smul.addr %s460, 8
          %s462 = scalar_lea.vmem %s9, %s461
        $region64: #{tpu_custom_call.1} parent=47 // pred_fallthru
          _
      $region48: #{tpu_custom_call.1} parent=5 // pred_fallthru
        _
      %p463 = scmp.le.s32.totalorder 1, %s29
      %p464 = scmp.lt.s32.totalorder %s29, 5
      %p465 = pnand %p463, %p464
      %p466 = pneg %p465
      // Predicated region
      $region65: #{tpu_custom_call.1} parent=5 // pred_check
        _
      $region66: #{tpu_custom_call.1} parent=5 // pred_check_branch
        %468 = sbr.rel (%p465) target = $region68
      $region67: #{tpu_custom_call.1} parent=5 // pred_region
        %s469 = ssub.s32 %s29, 1
        %s470 = sand.u32 %s84, 1
        %s471 = scalar_lea.sflag [#allocation3], %s470
        %s472 = sand.u32 %s84, 1
        %s473 = smul.addr %s472, 8
        %s474 = scalar_lea.vmem [#allocation2], %s473
        // Predicated region
        $region69: #{tpu_custom_call.1} parent=67 // pred_check
          %p475 = pneg %p97
        $region70: #{tpu_custom_call.1} parent=67 // pred_check_branch
          %477 = sbr.rel (%p475) target = $region72
        $region71: #{tpu_custom_call.1} parent=67 // pred_region
          %478 = dma.done %s471, 128
        $region72: #{tpu_custom_call.1} parent=67 // pred_fallthru
          _
        %p479 = scmp.lt.s32.totalorder %s38, 1
        %s480 = scalar_select %p479, %s38, 1
        %p481 = scmp.lt.s32.totalorder %s39, 1
        %s482 = scalar_select %p481, %s39, 1
        %s483 = smul.addr %s480, 2
        %s484 = sadd.s32 %s482, %s483
        %s485 = smul.addr %s484, 8
        %s486 = scalar_lea.vmem %s0, %s485
        %p487 = pneg %p69
        %p488 = pneg %p66
        %s489 = sand.u32 %s84, 1
        %s490 = scalar_lea.sflag [#allocation3], %s489
        %s491 = sand.u32 %s84, 1
        %s492 = smul.addr %s491, 8
        %s493 = scalar_lea.vmem [#allocation2], %s492
        %p494 = pneg %p97
        %p495 = pneg %p94
        %p496 = pneg %p118
        %p497 = pneg %p115
        %p498 = pneg %p139
        %p499 = pneg %p136
        %p500 = pneg %p160
        %p501 = pneg %p157
        %p502 = pneg %p181
        %p503 = pneg %p178
        %p504 = pneg %p202
        %p505 = pneg %p199
        %p506 = pneg %p223
        %p507 = pneg %p220
        %p508 = scmp.lt.s32.totalorder %s38, 1
        %s509 = scalar_select %p508, %s38, 1
        %s510 = smul.addr %s509, 8
        %s511 = scalar_lea.vmem %s8, %s510
        %p512 = pneg %p249
        %p513 = pneg %p246
        %p514 = scmp.lt.s32.totalorder %s38, 1
        %s515 = scalar_select %p514, %s38, 1
        %s516 = smul.addr %s515, 8
        %s517 = scalar_lea.vmem %s9, %s516
        %p518 = pneg %p275
        %p519 = pneg %p272
        %p520 = pneg %p296
        %p521 = pneg %p293
        %p522 = pneg %p317
        %p523 = pneg %p314
        %p524 = pneg %p345
        %p525 = pneg %p342
        %s526 = sand.u32 %s332, 1
        %s527 = scalar_lea.sflag [#allocation4], %s526
        %s528 = sand.u32 %s332, 1
        %s529 = smul.addr %s528, 8
        %s530 = scalar_lea.vmem [#allocation5], %s529
        %p531 = pneg %p373
        %p532 = pneg %p370
        %s533 = sand.u32 %s360, 1
        %s534 = scalar_lea.sflag [#allocation7], %s533
        %s535 = sand.u32 %s360, 1
        %s536 = smul.addr %s535, 8
        %s537 = scalar_lea.vmem [#allocation6], %s536
        %p538 = scmp.lt.s32.totalorder %s38, 1
        %s539 = scalar_select %p538, %s38, 1
        %p540 = scmp.lt.s32.totalorder %s39, 1
        %s541 = scalar_select %p540, %s39, 1
        %s542 = smul.addr %s539, 2
        %s543 = sadd.s32 %s541, %s542
        %s544 = smul.addr %s543, 8
        %s545 = scalar_lea.vmem %s0, %s544
        %p546 = scmp.lt.s32.totalorder %s38, 1
        %s547 = scalar_select %p546, %s38, 1
        %s548 = smul.addr %s547, 8
        %s549 = scalar_lea.vmem %s8, %s548
        %p550 = scmp.lt.s32.totalorder %s38, 1
        %s551 = scalar_select %p550, %s38, 1
        %s552 = smul.addr %s551, 8
        %s553 = scalar_lea.vmem %s9, %s552
        %v555 = vld [vmem:[%s545] sm:$0xff]
        %v556 = vpack.c.bf16 %v555, %v555
        %v557 = vld [vmem:[%s474] sm:$0xf]
        %v558 = vld [vmem:[%s474 + $0x4] sm:$0xf]
        %v559 = vld [vmem:[%s2] sm:$0xf]
        %v560 = vld [vmem:[%s4] sm:$0xf]
        %v563 = vunpack.c.l.b16 %v557
        %v564 = vunpack.c.l.b16 %v558
        %v565 = vpack.c.b16 %v564, %v563
        %vm567 = vcmask 130048
        %v569 = vsel %vm567, %v560, 0
        %571 = vmatprep.subr.bf16.mxu0 0
        %572 = vmatpush1.bf16.msra.mxu0 %v565
        %573 = vmatprep.subr.bf16.mxu0 0
        %574 = vmatpush1.bf16.msra.mxu0 0
        %575 = vmatprep.subr.bf16.mxu0 0
        %576 = vmatpush1.bf16.msra.mxu0 0
        %577 = vmatprep.subr.bf16.mxu0 0
        %578 = vmatpush1.bf16.msra.mxu0 0
        %579 = vmatprep.subr.bf16.mxu0 0
        %580 = vmatpush1.bf16.msra.mxu0 0
        %581 = vmatprep.subr.bf16.mxu0 0
        %582 = vmatpush1.bf16.msra.mxu0 0
        %583 = vmatprep.subr.bf16.mxu0 0
        %584 = vmatpush1.bf16.msra.mxu0 0
        %585 = vmatprep.subr.bf16.mxu0 0
        %586 = vmatpush1.bf16.msra.mxu0 0
        %587 = vmatprep.subr.bf16.mxu0 0
        %588 = vmatpush1.bf16.msra.mxu0 0
        %589 = vmatprep.subr.bf16.mxu0 0
        %590 = vmatpush1.bf16.msra.mxu0 0
        %591 = vmatprep.subr.bf16.mxu0 0
        %592 = vmatpush1.bf16.msra.mxu0 0
        %593 = vmatprep.subr.bf16.mxu0 0
        %594 = vmatpush1.bf16.msra.mxu0 0
        %595 = vmatprep.subr.bf16.mxu0 0
        %596 = vmatpush1.bf16.msra.mxu0 0
        %597 = vmatprep.subr.bf16.mxu0 0
        %598 = vmatpush1.bf16.msra.mxu0 0
        %599 = vmatprep.subr.bf16.mxu0 0
        %600 = vmatpush1.bf16.msra.mxu0 0
        %601 = vmatprep.subr.bf16.mxu0 0
        %602 = vmatpush1.bf16.msra.mxu0 0
        %603 = vmatprep.mubr.bf16.mxu0 0
        %604 = vmatmul.mubr.bf16.gmra.mrb[0].mxu0 %v569
        %v605 = vpop.f32.mrb[0].mxu0
        %v606 = vadd.f32 0.0, %v605
        %v607 = vpop.f32.mrb[0].mxu0
        %v608 = vpop.f32.mrb[0].mxu0
        %v609 = vpop.f32.mrb[0].mxu0
        %610 = vdwg.mxu0
        %vm611 = vcmask 64512
        %v613 = vsel %vm611, %v559, 0
        %vm615 = vcmask 1043456
        %v617 = vsel %vm615, %v556, 0
        %619 = vmatprep.subr.bf16.mxu0 0
        %620 = vmatpush1.bf16.msra.mxu0 %v617
        %621 = vmatprep.subr.bf16.mxu0 0
        %622 = vmatpush1.bf16.msra.mxu0 0
        %623 = vmatprep.subr.bf16.mxu0 0
        %624 = vmatpush1.bf16.msra.mxu0 0
        %625 = vmatprep.subr.bf16.mxu0 0
        %626 = vmatpush1.bf16.msra.mxu0 0
        %627 = vmatprep.subr.bf16.mxu0 0
        %628 = vmatpush1.bf16.msra.mxu0 0
        %629 = vmatprep.subr.bf16.mxu0 0
        %630 = vmatpush1.bf16.msra.mxu0 0
        %631 = vmatprep.subr.bf16.mxu0 0
        %632 = vmatpush1.bf16.msra.mxu0 0
        %633 = vmatprep.subr.bf16.mxu0 0
        %634 = vmatpush1.bf16.msra.mxu0 0
        %635 = vmatprep.subr.bf16.mxu0 0
        %636 = vmatpush1.bf16.msra.mxu0 0
        %637 = vmatprep.subr.bf16.mxu0 0
        %638 = vmatpush1.bf16.msra.mxu0 0
        %639 = vmatprep.subr.bf16.mxu0 0
        %640 = vmatpush1.bf16.msra.mxu0 0
        %641 = vmatprep.subr.bf16.mxu0 0
        %642 = vmatpush1.bf16.msra.mxu0 0
        %643 = vmatprep.subr.bf16.mxu0 0
        %644 = vmatpush1.bf16.msra.mxu0 0
        %645 = vmatprep.subr.bf16.mxu0 0
        %646 = vmatpush1.bf16.msra.mxu0 0
        %647 = vmatprep.subr.bf16.mxu0 0
        %648 = vmatpush1.bf16.msra.mxu0 0
        %649 = vmatprep.subr.bf16.mxu0 0
        %650 = vmatpush1.bf16.msra.mxu0 0
        %651 = vmatprep.mubr.bf16.mxu0 0
        %652 = vmatmul.mubr.bf16.gmra.mrb[0].mxu0 %v613
        %v653 = vpop.f32.mrb[0].mxu0
        %v654 = vadd.f32 %v606, %v653
        %v655 = vpop.f32.mrb[0].mxu0
        %v656 = vpop.f32.mrb[0].mxu0
        %v657 = vpop.f32.mrb[0].mxu0
        %658 = vdwg.mxu0
        %v659 = vld [vmem:[%s549] sm:$0xff]
        %661 = vset.pattern.permute.xlu0 0
        %662 = vperm.xlu0 %661, %v659
        %v663 = vpop.permute.xlu0 %662
        %v665 = vadd.f32 %v654, %v663
        %v666 = vld [vmem:[%s3] sm:$0xf]
        %v667 = vld [vmem:[%s5] sm:$0xf]
        %v669 = vsel %vm567, %v667, 0
        %671 = vmatprep.subr.bf16.mxu0 0
        %672 = vmatpush1.bf16.msra.mxu0 %v565
        %673 = vmatprep.subr.bf16.mxu0 0
        %674 = vmatpush1.bf16.msra.mxu0 0
        %675 = vmatprep.subr.bf16.mxu0 0
        %676 = vmatpush1.bf16.msra.mxu0 0
        %677 = vmatprep.subr.bf16.mxu0 0
        %678 = vmatpush1.bf16.msra.mxu0 0
        %679 = vmatprep.subr.bf16.mxu0 0
        %680 = vmatpush1.bf16.msra.mxu0 0
        %681 = vmatprep.subr.bf16.mxu0 0
        %682 = vmatpush1.bf16.msra.mxu0 0
        %683 = vmatprep.subr.bf16.mxu0 0
        %684 = vmatpush1.bf16.msra.mxu0 0
        %685 = vmatprep.subr.bf16.mxu0 0
        %686 = vmatpush1.bf16.msra.mxu0 0
        %687 = vmatprep.subr.bf16.mxu0 0
        %688 = vmatpush1.bf16.msra.mxu0 0
        %689 = vmatprep.subr.bf16.mxu0 0
        %690 = vmatpush1.bf16.msra.mxu0 0
        %691 = vmatprep.subr.bf16.mxu0 0
        %692 = vmatpush1.bf16.msra.mxu0 0
        %693 = vmatprep.subr.bf16.mxu0 0
        %694 = vmatpush1.bf16.msra.mxu0 0
        %695 = vmatprep.subr.bf16.mxu0 0
        %696 = vmatpush1.bf16.msra.mxu0 0
        %697 = vmatprep.subr.bf16.mxu0 0
        %698 = vmatpush1.bf16.msra.mxu0 0
        %699 = vmatprep.subr.bf16.mxu0 0
        %700 = vmatpush1.bf16.msra.mxu0 0
        %701 = vmatprep.subr.bf16.mxu0 0
        %702 = vmatpush1.bf16.msra.mxu0 0
        %703 = vmatprep.mubr.bf16.mxu0 0
        %704 = vmatmul.mubr.bf16.gmra.mrb[0].mxu0 %v669
        %v705 = vpop.f32.mrb[0].mxu0
        %v706 = vadd.f32 0.0, %v705
        %v707 = vpop.f32.mrb[0].mxu0
        %v708 = vpop.f32.mrb[0].mxu0
        %v709 = vpop.f32.mrb[0].mxu0
        %710 = vdwg.mxu0
        %v712 = vsel %vm611, %v666, 0
        %714 = vmatprep.subr.bf16.mxu0 0
        %715 = vmatpush1.bf16.msra.mxu0 %v617
        %716 = vmatprep.subr.bf16.mxu0 0
        %717 = vmatpush1.bf16.msra.mxu0 0
        %718 = vmatprep.subr.bf16.mxu0 0
        %719 = vmatpush1.bf16.msra.mxu0 0
        %720 = vmatprep.subr.bf16.mxu0 0
        %721 = vmatpush1.bf16.msra.mxu0 0
        %722 = vmatprep.subr.bf16.mxu0 0
        %723 = vmatpush1.bf16.msra.mxu0 0
        %724 = vmatprep.subr.bf16.mxu0 0
        %725 = vmatpush1.bf16.msra.mxu0 0
        %726 = vmatprep.subr.bf16.mxu0 0
        %727 = vmatpush1.bf16.msra.mxu0 0
        %728 = vmatprep.subr.bf16.mxu0 0
        %729 = vmatpush1.bf16.msra.mxu0 0
        %730 = vmatprep.subr.bf16.mxu0 0
        %731 = vmatpush1.bf16.msra.mxu0 0
        %732 = vmatprep.subr.bf16.mxu0 0
        %733 = vmatpush1.bf16.msra.mxu0 0
        %734 = vmatprep.subr.bf16.mxu0 0
        %735 = vmatpush1.bf16.msra.mxu0 0
        %736 = vmatprep.subr.bf16.mxu0 0
        %737 = vmatpush1.bf16.msra.mxu0 0
        %738 = vmatprep.subr.bf16.mxu0 0
        %739 = vmatpush1.bf16.msra.mxu0 0
        %740 = vmatprep.subr.bf16.mxu0 0
        %741 = vmatpush1.bf16.msra.mxu0 0
        %742 = vmatprep.subr.bf16.mxu0 0
        %743 = vmatpush1.bf16.msra.mxu0 0
        %744 = vmatprep.subr.bf16.mxu0 0
        %745 = vmatpush1.bf16.msra.mxu0 0
        %746 = vmatprep.mubr.bf16.mxu0 0
        %747 = vmatmul.mubr.bf16.gmra.mrb[0].mxu0 %v712
        %v748 = vpop.f32.mrb[0].mxu0
        %v749 = vadd.f32 %v706, %v748
        %v750 = vpop.f32.mrb[0].mxu0
        %v751 = vpop.f32.mrb[0].mxu0
        %v752 = vpop.f32.mrb[0].mxu0
        %753 = vdwg.mxu0
        %v754 = vld [vmem:[%s553] sm:$0xff]
        %756 = vset.pattern.permute.xlu0 0
        %757 = vperm.xlu0 %756, %v754
        %v758 = vpop.permute.xlu0 %757
        %v760 = vadd.f32 %v749, %v758
        %v761 = vxor.u32 %v665, 2147483648
        %v762 = vmul.f32 %v761, 1.442695
        %v763 = vpow.pop %v762
        %v764 = vadd.f32 %v763, 1.0
        %v765 = vrcp.pop %v764
        %v766 = vmul.f32 1.0, %v765
        %v767 = vtanh.pop %v760
        %v768 = vmul.f32 %v766, %v767
        %v769 = vpack.c.bf16 %v768, %v768
        %v770 = vld [vmem:[%s6] sm:$0xf]
        %v771 = vld [vmem:[%s10] sm:$0xff]
        %773 = vset.pattern.permute.xlu0 0
        %774 = vperm.xlu0 %773, %v771
        %v775 = vpop.permute.xlu0 %774
        %v778 = vsel %vm611, %v770, 0
        %v781 = vsel %vm615, %v769, 0
        %783 = vmatprep.subr.bf16.mxu0 0
        %784 = vmatpush1.bf16.msra.mxu0 %v781
        %785 = vmatprep.subr.bf16.mxu0 0
        %786 = vmatpush1.bf16.msra.mxu0 0
        %787 = vmatprep.subr.bf16.mxu0 0
        %788 = vmatpush1.bf16.msra.mxu0 0
        %789 = vmatprep.subr.bf16.mxu0 0
        %790 = vmatpush1.bf16.msra.mxu0 0
        %791 = vmatprep.subr.bf16.mxu0 0
        %792 = vmatpush1.bf16.msra.mxu0 0
        %793 = vmatprep.subr.bf16.mxu0 0
        %794 = vmatpush1.bf16.msra.mxu0 0
        %795 = vmatprep.subr.bf16.mxu0 0
        %796 = vmatpush1.bf16.msra.mxu0 0
        %797 = vmatprep.subr.bf16.mxu0 0
        %798 = vmatpush1.bf16.msra.mxu0 0
        %799 = vmatprep.subr.bf16.mxu0 0
        %800 = vmatpush1.bf16.msra.mxu0 0
        %801 = vmatprep.subr.bf16.mxu0 0
        %802 = vmatpush1.bf16.msra.mxu0 0
        %803 = vmatprep.subr.bf16.mxu0 0
        %804 = vmatpush1.bf16.msra.mxu0 0
        %805 = vmatprep.subr.bf16.mxu0 0
        %806 = vmatpush1.bf16.msra.mxu0 0
        %807 = vmatprep.subr.bf16.mxu0 0
        %808 = vmatpush1.bf16.msra.mxu0 0
        %809 = vmatprep.subr.bf16.mxu0 0
        %810 = vmatpush1.bf16.msra.mxu0 0
        %811 = vmatprep.subr.bf16.mxu0 0
        %812 = vmatpush1.bf16.msra.mxu0 0
        %813 = vmatprep.subr.bf16.mxu0 0
        %814 = vmatpush1.bf16.msra.mxu0 0
        %815 = vmatprep.mubr.bf16.mxu0 0
        %816 = vmatmul.mubr.bf16.gmra.mrb[0].mxu0 %v778
        %v817 = vpop.f32.mrb[0].mxu0
        %v818 = vadd.f32 %v775, %v817
        %v819 = vpop.f32.mrb[0].mxu0
        %v820 = vpop.f32.mrb[0].mxu0
        %v821 = vpop.f32.mrb[0].mxu0
        %822 = vdwg.mxu0
        %v823 = vld [vmem:[%s7] sm:$0xf]
        %v824 = vld [vmem:[%s11] sm:$0xff]
        %826 = vset.pattern.permute.xlu0 0
        %827 = vperm.xlu0 %826, %v824
        %v828 = vpop.permute.xlu0 %827
        %v831 = vsel %vm611, %v823, 0
        %833 = vmatprep.subr.bf16.mxu0 0
        %834 = vmatpush1.bf16.msra.mxu0 %v781
        %835 = vmatprep.subr.bf16.mxu0 0
        %836 = vmatpush1.bf16.msra.mxu0 0
        %837 = vmatprep.subr.bf16.mxu0 0
        %838 = vmatpush1.bf16.msra.mxu0 0
        %839 = vmatprep.subr.bf16.mxu0 0
        %840 = vmatpush1.bf16.msra.mxu0 0
        %841 = vmatprep.subr.bf16.mxu0 0
        %842 = vmatpush1.bf16.msra.mxu0 0
        %843 = vmatprep.subr.bf16.mxu0 0
        %844 = vmatpush1.bf16.msra.mxu0 0
        %845 = vmatprep.subr.bf16.mxu0 0
        %846 = vmatpush1.bf16.msra.mxu0 0
        %847 = vmatprep.subr.bf16.mxu0 0
        %848 = vmatpush1.bf16.msra.mxu0 0
        %849 = vmatprep.subr.bf16.mxu0 0
        %850 = vmatpush1.bf16.msra.mxu0 0
        %851 = vmatprep.subr.bf16.mxu0 0
        %852 = vmatpush1.bf16.msra.mxu0 0
        %853 = vmatprep.subr.bf16.mxu0 0
        %854 = vmatpush1.bf16.msra.mxu0 0
        %855 = vmatprep.subr.bf16.mxu0 0
        %856 = vmatpush1.bf16.msra.mxu0 0
        %857 = vmatprep.subr.bf16.mxu0 0
        %858 = vmatpush1.bf16.msra.mxu0 0
        %859 = vmatprep.subr.bf16.mxu0 0
        %860 = vmatpush1.bf16.msra.mxu0 0
        %861 = vmatprep.subr.bf16.mxu0 0
        %862 = vmatpush1.bf16.msra.mxu0 0
        %863 = vmatprep.subr.bf16.mxu0 0
        %864 = vmatpush1.bf16.msra.mxu0 0
        %865 = vmatprep.mubr.bf16.mxu0 0
        %866 = vmatmul.mubr.bf16.gmra.mrb[0].mxu0 %v831
        %v867 = vpop.f32.mrb[0].mxu0
        %v868 = vadd.f32 %v828, %v867
        %v869 = vpop.f32.mrb[0].mxu0
        %v870 = vpop.f32.mrb[0].mxu0
        %v871 = vpop.f32.mrb[0].mxu0
        %872 = vdwg.mxu0
        %v873 = vadd.f32 %v555, %v818
        %v874 = vmul.f32 %v873, 0.70710677
        %875 = vst [vmem:[%s530] sm:$0xff] %v874
        %876 = vst [vmem:[%s537] sm:$0xff] %v868
        %s877 = sand.u32 %s332, 1
        %s878 = scalar_lea.sflag [#allocation4], %s877
        %s879 = sand.u32 %s332, 1
        %s880 = smul.addr %s879, 8
        %s881 = scalar_lea.vmem [#allocation5], %s880
        %s882 = sand.u32 %s360, 1
        %s883 = scalar_lea.sflag [#allocation7], %s882
        %s884 = sand.u32 %s360, 1
        %s885 = smul.addr %s884, 8
        %s886 = scalar_lea.vmem [#allocation6], %s885
        // Predicated region
        $region73: #{tpu_custom_call.1} parent=67 // pred_check
          %p887 = pneg %p342
        $region74: #{tpu_custom_call.1} parent=67 // pred_check_branch
          %889 = sbr.rel (%p887) target = $region76
        $region75: #{tpu_custom_call.1} parent=67 // pred_region
          %s891 = ssub.s32 128, 128
          %892 = vsyncadd %s878, %s891
          %s893 = smul.addr %s38, 2
          %s894 = sadd.s32 %s39, %s893
          %s895 = smul.addr %s894, 128
          %s896 = scalar_lea.hbm %s12, %s895
          %s898 = sshll.u32 %s881, 4
          %s899 = int_to_ptr.vmem [resolvable:$true] %s898
          %901 = dma.vmem_to_hbm [thread:$0]  %s899, 128, %s896, %s878
        $region76: #{tpu_custom_call.1} parent=67 // pred_fallthru
          _
        // Predicated region
        $region77: #{tpu_custom_call.1} parent=67 // pred_check
          %p902 = pneg %p370
        $region78: #{tpu_custom_call.1} parent=67 // pred_check_branch
          %904 = sbr.rel (%p902) target = $region80
        $region79: #{tpu_custom_call.1} parent=67 // pred_region
          %s906 = ssub.s32 128, 128
          %907 = vsyncadd %s883, %s906
          %s908 = smul.addr %s38, 2
          %s909 = sadd.s32 %s39, %s908
          %s910 = smul.addr %s909, 128
          %s911 = scalar_lea.hbm %s13, %s910
          %s913 = sshll.u32 %s886, 4
          %s914 = int_to_ptr.vmem [resolvable:$true] %s913
          %916 = dma.vmem_to_hbm [thread:$0]  %s914, 128, %s911, %s883
        $region80: #{tpu_custom_call.1} parent=67 // pred_fallthru
          _
      $region68: #{tpu_custom_call.1} parent=5 // pred_fallthru
        _
      %p917 = scmp.le.s32.totalorder 2, %s29
      // Predicated region
      $region81: #{tpu_custom_call.1} parent=5 // pred_check
        %p918 = pneg %p917
      $region82: #{tpu_custom_call.1} parent=5 // pred_check_branch
        %920 = sbr.rel (%p918) target = $region84
      $region83: #{tpu_custom_call.1} parent=5 // pred_region
        %s921 = ssub.s32 %s29, 2
        // Predicated region
        $region85: #{tpu_custom_call.1} parent=83 // pred_check
          %p922 = pneg %p348
        $region86: #{tpu_custom_call.1} parent=83 // pred_check_branch
          %924 = sbr.rel (%p922) target = $region88
        $region87: #{tpu_custom_call.1} parent=83 // pred_region
          %s925 = sand.u32 %s333, 1
          %s926 = scalar_lea.sflag [#allocation4], %s925
          %s927 = sand.u32 %s333, 1
          %s928 = smul.addr %s927, 8
          %s929 = scalar_lea.vmem [#allocation5], %s928
          %930 = dma.done %s926, 128
        $region88: #{tpu_custom_call.1} parent=83 // pred_fallthru
          _
        // Predicated region
        $region89: #{tpu_custom_call.1} parent=83 // pred_check
          %p931 = pneg %p376
        $region90: #{tpu_custom_call.1} parent=83 // pred_check_branch
          %933 = sbr.rel (%p931) target = $region92
        $region91: #{tpu_custom_call.1} parent=83 // pred_region
          %s934 = sand.u32 %s361, 1
          %s935 = scalar_lea.sflag [#allocation7], %s934
          %s936 = sand.u32 %s361, 1
          %s937 = smul.addr %s936, 8
          %s938 = scalar_lea.vmem [#allocation6], %s937
          %939 = dma.done %s935, 128
        $region92: #{tpu_custom_call.1} parent=83 // pred_fallthru
          _
      $region84: #{tpu_custom_call.1} parent=5 // pred_fallthru
        _
    $region6: #{tpu_custom_call.1} parent=1 // loop_footer
      %s33 = sadd.s32 1, %s29
    $region7: #{tpu_custom_call.1} parent=1 // loop_footer_branch
      %28 = sbr.rel target = $region3
    $region8: #{tpu_custom_call.1} parent=1 // loop_exit
      _
    %940 = vsyncpa [#allocation3], 1
    %s941 = scalar_lea.sflag [#allocation3], 1
    %942 = vsyncpa %s941, 1
    %943 = vsyncpa [#allocation4], 1
    %s944 = scalar_lea.sflag [#allocation4], 1
    %945 = vsyncpa %s944, 1
    %946 = vsyncpa [#allocation7], 1
    %s947 = scalar_lea.sflag [#allocation7], 1
    %948 = vsyncpa %s947, 1

</llo_original>
